<compile_context>
chip_gen: v7x
topology: tpu7x:2x2x1
jax: 0.10.0
libtpu: 0.0.40
codegen_flags: <defaults>
</compile_context>

<pallas_src>
import numpy as np
import jax
import jax.numpy as jnp
from jax.experimental import pallas as pl
from jax.experimental.pallas import tpu as pltpu  # noqa: F401  (kept for TPU-specific tuning hooks)


# ----------------------------------------------------------------------------
# Fused kernel: whole decoder, whole batch, one invocation (no grid).
# ----------------------------------------------------------------------------
def _fused_decoder_kernel(x0_ref, x1_ref, x2_ref, x3_ref,
                          w_ref, b_ref, bk10_ref, bk20_ref, bk30_ref,
                          o_ref):
    f32 = jnp.float32
    # Three independent lane-dense upsample matmuls to full resolution
    # (block-diagonal over the batch folded into lanes).
    u1 = jnp.dot(x1_ref[...], bk10_ref[...], preferred_element_type=f32)   # (C1, N*HW0)
    u2 = jnp.dot(x2_ref[...], bk20_ref[...], preferred_element_type=f32)   # (C2, N*HW0)
    u3 = jnp.dot(x3_ref[...], bk30_ref[...], preferred_element_type=f32)   # (C3, N*HW0)

    # Channel-stacked slab of all levels at full resolution: (Ctot, N*HW0).
    slab = jnp.concatenate([x0_ref[...].astype(f32), u1, u2, u3], axis=0)

    # Single fused conv1x1 over all levels + collapsed bias.
    out = jnp.dot(w_ref[...], slab, preferred_element_type=f32) + b_ref[...]
    o_ref[...] = out.astype(o_ref.dtype)


# ----------------------------------------------------------------------------
# Interpolation-matrix construction (host-side numpy, trace-time constants)
# ----------------------------------------------------------------------------
def _interp_matrix(in_size, out_size):
    """1-D bilinear resize matrix, align_corners=True (matches F.interpolate)."""
    A = np.zeros((out_size, in_size), dtype=np.float64)
    if out_size == 1:
        A[0, 0] = 1.0
    else:
        scale = (in_size - 1) / (out_size - 1)
        for i in range(out_size):
            s = i * scale
            lo = min(int(np.floor(s)), in_size - 1)
            hi = min(lo + 1, in_size - 1)
            frac = s - lo
            A[i, lo] += 1.0 - frac
            A[i, hi] += frac
    return A


def _kron_interp_T(hin, win, hout, wout):
    """Transposed 2-D bilinear resize matrix acting on row-major flattened HW."""
    Ah = _interp_matrix(hin, hout)          # (hout, hin)
    Aw = _interp_matrix(win, wout)          # (wout, win)
    return np.kron(Ah, Aw).T                # (hin*win, hout*wout), float64


def _block_diag(K, n):
    """Block-diagonal replication of K (for batch folded into lanes)."""
    r, c = K.shape
    B = np.zeros((n * r, n * c), dtype=K.dtype)
    for i in range(n):
        B[i * r:(i + 1) * r, i * c:(i + 1) * c] = K
    return B


# ----------------------------------------------------------------------------
# Wrapper
# ----------------------------------------------------------------------------
def vanilla_fpn_decoder(x, params):
    """x: list of 4 NCHW feature maps, x[0] highest res ... x[3] lowest res."""
    (w1, b1), (w2, b2), (w3, b3), (w4, b4) = params
    N = x[0].shape[0]
    dim = w1.shape[0]
    C = [xi.shape[1] for xi in x]
    H = [xi.shape[2] for xi in x]
    W = [xi.shape[3] for xi in x]
    HW = [H[i] * W[i] for i in range(4)]
    NL = N * HW[0]                              # lanes of the final output

    # Fold batch into lanes: (N, C, H, W) -> (C, N*HW).  Pure layout plumbing
    # outside the kernel; final kernel store is NL = 512 lanes, unmasked.
    xf = [jnp.transpose(x[i].reshape(N, C[i], HW[i]), (1, 0, 2)).reshape(C[i], N * HW[i])
          for i in range(4)]

    # Per-step interpolation matrices, composed to full resolution (exactly
    # reproduces the progressive F.interpolate chain of the reference).
    k32 = _kron_interp_T(H[3], W[3], H[2], W[2])        # (HW3, HW2)
    k21 = _kron_interp_T(H[2], W[2], H[1], W[1])        # (HW2, HW1)
    k10 = _kron_interp_T(H[1], W[1], H[0], W[0])        # (HW1, HW0)
    k20 = k21 @ k10                                     # (HW2, HW0)
    k30 = k32 @ k20                                     # (HW3, HW0)
    bk10 = jnp.asarray(_block_diag(k10, N).astype(np.float32))   # (N*HW1, NL)
    bk20 = jnp.asarray(_block_diag(k20, N).astype(np.float32))   # (N*HW2, NL)
    bk30 = jnp.asarray(_block_diag(k30, N).astype(np.float32))   # (N*HW3, NL)

    # One weight block; channel order matches the slab [x0, x1, x2, x3].
    w_all = jnp.concatenate([w4, w3, w2, w1], axis=1).astype(jnp.float32)   # (dim, Ctot)
    # Bias collapse valid because bilinear align_corners=True rows sum to 1.
    b_sum = (b1 + b2 + b3 + b4).astype(jnp.float32).reshape(dim, 1)

    ctot = sum(C)
    flops = 2 * (sum(C[l] * (N * HW[l]) * NL for l in (1, 2, 3)) + ctot * NL * dim)
    bytes_accessed = 4 * (sum(C[l] * N * HW[l] for l in range(4))
                          + sum((N * HW[l]) * NL for l in (1, 2, 3))
                          + dim * ctot + dim + dim * NL)

    out2d = pl.pallas_call(
        _fused_decoder_kernel,
        out_shape=jax.ShapeDtypeStruct((dim, NL), x[0].dtype),
        cost_estimate=pl.CostEstimate(flops=flops,
                                      transcendentals=0,
                                      bytes_accessed=bytes_accessed),
    )(xf[0], xf[1], xf[2], xf[3], w_all, b_sum, bk10, bk20, bk30)

    # (dim, N*HW0) -> (N, dim, H0, W0)
    return out2d.reshape(dim, N, H[0], W[0]).transpose(1, 0, 2, 3)


# ----------------------------------------------------------------------------
# Pure-JAX reference (progressive chain, matches the PyTorch module)
# ----------------------------------------------------------------------------
def _ref_conv1x1(x, w, b):
    return jnp.einsum("nihw,oi->nohw", x, w) + b[None, :, None, None]


def _ref_upsample_add(prev, skip):
    Ah = jnp.asarray(_interp_matrix(prev.shape[2], skip.shape[2]).astype(np.float32))
    Aw = jnp.asarray(_interp_matrix(prev.shape[3], skip.shape[3]).astype(np.float32))
    up = jnp.einsum("oh,nchw,pw->ncop", Ah, prev, Aw)
    return skip + up


def _ref_decoder(x, params):
    (w1, b1), (w2, b2), (w3, b3), (w4, b4) = params
    out = _ref_conv1x1(x[3], w1, b1)
    out = _ref_upsample_add(out, _ref_conv1x1(x[2], w2, b2))
    out = _ref_upsample_add(out, _ref_conv1x1(x[1], w3, b3))
    out = _ref_upsample_add(out, _ref_conv1x1(x[0], w4, b4))
    return out


# ----------------------------------------------------------------------------
if __name__ == "__main__":
    key = jax.random.PRNGKey(0)

    filters = [8, 16, 32, 64]      # channels of x[0], x[1], x[2], x[3]
    dim = 32
    N = 2
    spatial = [16, 8, 4, 2]        # H=W of x[0], x[1], x[2], x[3]

    ks = jax.random.split(key, 8)
    x = [
        jax.random.normal(ks[i], (N, filters[i], spatial[i], spatial[i]), jnp.float32)
        for i in range(4)
    ]

    def make_params(k, cin, cout):
        kw, kb = jax.random.split(k)
        w = 0.1 * jax.random.normal(kw, (cout, cin), jnp.float32)
        b = 0.1 * jax.random.normal(kb, (cout,), jnp.float32)
        return w, b

    params = [
        make_params(ks[4], filters[3], dim),   # reduce1 (on x[3])
        make_params(ks[5], filters[2], dim),   # reduce2 (on x[2])
        make_params(ks[6], filters[1], dim),   # reduce3 (on x[1])
        make_params(ks[7], filters[0], dim),   # reduce4 (on x[0])
    ]

    out = vanilla_fpn_decoder(x, params)
    out = jax.block_until_ready(out)

    ref = _ref_decoder(x, params)
    assert out.shape == (N, dim, spatial[0], spatial[0]), out.shape
    np.testing.assert_allclose(np.asarray(out), np.asarray(ref), rtol=1e-4, atol=1e-4)

    print("KERNEL_OK")
</pallas_src>

<mosaic_0001>
module attributes {stable_mosaic.version = 11 : i64} {
  func.func @_fused_decoder_kernel(%arg0: memref<8x512xf32, #tpu.memory_space<vmem>>, %arg1: memref<16x128xf32, #tpu.memory_space<vmem>>, %arg2: memref<32x32xf32, #tpu.memory_space<vmem>>, %arg3: memref<64x8xf32, #tpu.memory_space<vmem>>, %arg4: memref<32x120xf32, #tpu.memory_space<vmem>>, %arg5: memref<32x1xf32, #tpu.memory_space<vmem>>, %arg6: memref<128x512xf32, #tpu.memory_space<vmem>>, %arg7: memref<32x512xf32, #tpu.memory_space<vmem>>, %arg8: memref<8x512xf32, #tpu.memory_space<vmem>>, %arg9: memref<32x512xf32, #tpu.memory_space<vmem>>) attributes {dimension_semantics = [], scalar_prefetch = 0 : i64, scratch_operands = 0 : i64, tpu.core_type = #tpu.core_type<tc>} {
    %c0 = arith.constant 0 : index
    %c0_0 = arith.constant 0 : index
    %0 = vector.load %arg1[%c0, %c0_0] : memref<16x128xf32, #tpu.memory_space<vmem>>, vector<16x128xf32>
    %c0_1 = arith.constant 0 : index
    %c0_2 = arith.constant 0 : index
    %1 = vector.load %arg6[%c0_1, %c0_2] : memref<128x512xf32, #tpu.memory_space<vmem>>, vector<128x512xf32>
    %cst = arith.constant dense<0.000000e+00> : vector<16x512xf32>
    %2 = tpu.matmul %0, %1, %cst {dimension_numbers = #tpu.dot_dimension_numbers<[1], [0], [0], [1], [0, 0, 1, 1], [], []>} : vector<16x128xf32>, vector<128x512xf32>, vector<16x512xf32> -> vector<16x512xf32>
    %c0_3 = arith.constant 0 : index
    %c0_4 = arith.constant 0 : index
    %3 = vector.load %arg2[%c0_3, %c0_4] : memref<32x32xf32, #tpu.memory_space<vmem>>, vector<32x32xf32>
    %c0_5 = arith.constant 0 : index
    %c0_6 = arith.constant 0 : index
    %4 = vector.load %arg7[%c0_5, %c0_6] : memref<32x512xf32, #tpu.memory_space<vmem>>, vector<32x512xf32>
    %cst_7 = arith.constant dense<0.000000e+00> : vector<32x512xf32>
    %5 = tpu.matmul %3, %4, %cst_7 {dimension_numbers = #tpu.dot_dimension_numbers<[1], [0], [0], [1], [0, 0, 1, 1], [], []>} : vector<32x32xf32>, vector<32x512xf32>, vector<32x512xf32> -> vector<32x512xf32>
    %c0_8 = arith.constant 0 : index
    %c0_9 = arith.constant 0 : index
    %6 = vector.load %arg3[%c0_8, %c0_9] : memref<64x8xf32, #tpu.memory_space<vmem>>, vector<64x8xf32>
    %c0_10 = arith.constant 0 : index
    %c0_11 = arith.constant 0 : index
    %7 = vector.load %arg8[%c0_10, %c0_11] : memref<8x512xf32, #tpu.memory_space<vmem>>, vector<8x512xf32>
    %cst_12 = arith.constant dense<0.000000e+00> : vector<64x512xf32>
    %8 = tpu.matmul %6, %7, %cst_12 {dimension_numbers = #tpu.dot_dimension_numbers<[1], [0], [0], [1], [0, 0, 1, 1], [], []>} : vector<64x8xf32>, vector<8x512xf32>, vector<64x512xf32> -> vector<64x512xf32>
    %c0_13 = arith.constant 0 : index
    %c0_14 = arith.constant 0 : index
    %9 = vector.load %arg0[%c0_13, %c0_14] : memref<8x512xf32, #tpu.memory_space<vmem>>, vector<8x512xf32>
    %10 = tpu.concatenate %9, %2, %5, %8 in 0 : vector<8x512xf32>, vector<16x512xf32>, vector<32x512xf32>, vector<64x512xf32> -> vector<120x512xf32>
    %c0_15 = arith.constant 0 : index
    %c0_16 = arith.constant 0 : index
    %11 = vector.load %arg4[%c0_15, %c0_16] : memref<32x120xf32, #tpu.memory_space<vmem>>, vector<32x120xf32>
    %cst_17 = arith.constant dense<0.000000e+00> : vector<32x512xf32>
    %12 = tpu.matmul %11, %10, %cst_17 {dimension_numbers = #tpu.dot_dimension_numbers<[1], [0], [0], [1], [0, 0, 1, 1], [], []>} : vector<32x120xf32>, vector<120x512xf32>, vector<32x512xf32> -> vector<32x512xf32>
    %c0_18 = arith.constant 0 : index
    %c0_19 = arith.constant 0 : index
    %13 = vector.load %arg5[%c0_18, %c0_19] : memref<32x1xf32, #tpu.memory_space<vmem>>, vector<32x1xf32>
    %14 = vector.broadcast %13 : vector<32x1xf32> to vector<32x512xf32>
    %15 = arith.addf %12, %14 : vector<32x512xf32>
    %c0_20 = arith.constant 0 : index
    %c0_21 = arith.constant 0 : index
    %16 = vector.load %arg9[%c0_20, %c0_21] : memref<32x512xf32, #tpu.memory_space<vmem>>, vector<32x512xf32>
    tpu.vector_store %arg9[%c0_20, %c0_21], %15 {strides = array<i32>} : memref<32x512xf32, #tpu.memory_space<vmem>>, vector<32x512xf32>,
    return
  }
}

</mosaic_0001>

<llo_original>
// kernel: tpu_custom_call.1
$region0: #{tpu_custom_call.1}
  #allocation0 [shape = 'u32[]', space=smem, size = 0x4, offset = 0x4, fixed_abs, tag = 'smem constant byte address 0x4 - core index']
  #allocation1 [shape = 'u32[144,128]{1,0:T(1,128)}', space=vmem, size = 0x12000, scoped, tag = 'internal scratch']
  %s0 = inlined_call_operand.hbm [shape: f32[8,512], index: 0, kind: input, shape index: {}]
  %s1 = inlined_call_operand.hbm [shape: f32[16,128], index: 1, kind: input, shape index: {}]
  %s2 = inlined_call_operand.hbm [shape: f32[32,32], index: 2, kind: input, shape index: {}]
  %s3 = inlined_call_operand.vmem [shape: f32[64,8], index: 3, kind: input, shape index: {}]
  %s4 = inlined_call_operand.hbm [shape: f32[32,120], index: 4, kind: input, shape index: {}]
  %s5 = inlined_call_operand.vmem [shape: f32[32,1], index: 5, kind: input, shape index: {}]
  %s6 = inlined_call_operand.hbm [shape: f32[128,512], index: 6, kind: input, shape index: {}]
  %s7 = inlined_call_operand.vmem [shape: f32[32,512], index: 7, kind: input, shape index: {}]
  %s8 = inlined_call_operand.hbm [shape: f32[8,512], index: 8, kind: input, shape index: {}]
  %s9 = inlined_call_operand.hbm [shape: f32[32,512], index: 9, kind: output, shape index: {}]
  %s10 = sld [smem:[#allocation0]]
  $region70: #{tpu_custom_call.1} parent=0
    _
  %s12 = ssub.s32 1, %s10
  %s13 = scalar_select 0, %s12, %s10
  $region1: #{tpu_custom_call.1} parent=0
    #allocation2 [shape = 'u8[16384]{0}', space=vmem, size = 0x4000, scoped, tag = 'input window, operand 0, single buffered']
    #allocation3 [shape = 's32[1]{0}', space=sflag, size = 0x4, scoped, tag = 'scoped memory for tpu_custom_call.1']
    #allocation4 [shape = 's32[1]{0}', space=sflag, size = 0x4, scoped, tag = 'scoped memory for tpu_custom_call.1']
    #allocation5 [shape = 'u8[8192]{0}', space=vmem, size = 0x2000, scoped, tag = 'input window, operand 1, single buffered']
    #allocation6 [shape = 's32[1]{0}', space=sflag, size = 0x4, scoped, tag = 'scoped memory for tpu_custom_call.1']
    #allocation7 [shape = 'u8[16384]{0}', space=vmem, size = 0x4000, scoped, tag = 'input window, operand 2, single buffered']
    #allocation8 [shape = 'u8[16384]{0}', space=vmem, size = 0x4000, scoped, tag = 'input window, operand 4, single buffered']
    #allocation9 [shape = 's32[1]{0}', space=sflag, size = 0x4, scoped, tag = 'scoped memory for tpu_custom_call.1']
    #allocation10 [shape = 'u8[262144]{0}', space=vmem, size = 0x40000, scoped, tag = 'input window, operand 6, single buffered']
    #allocation11 [shape = 'u8[16384]{0}', space=vmem, size = 0x4000, scoped, tag = 'input window, operand 8, single buffered']
    #allocation12 [shape = 's32[1]{0}', space=sflag, size = 0x4, scoped, tag = 'scoped memory for tpu_custom_call.1']
    #allocation13 [shape = 'u8[65536]{0}', space=vmem, size = 0x10000, scoped, tag = 'output window, operand 0, single buffered']
    %14 = vsyncpa [#allocation3], 0
    %15 = vsyncpa [#allocation6], 0
    %16 = vsyncpa [#allocation9], 0
    %17 = vsyncpa [#allocation12], 0
    %18 = vsyncpa [#allocation4], 0
    // Predicated region
    $region2: #{tpu_custom_call.1} parent=1 // pred_check
      _
    $region3: #{tpu_custom_call.1} parent=1 // pred_check_branch
      %20 = sbr.rel (0) target = $region5
    $region4: #{tpu_custom_call.1} parent=1 // pred_region
      %s22 = ssub.s32 512, 512
      %23 = vsyncadd [#allocation3], %s22
      %s25 = sshll.u32 [#allocation2], 4
      %s26 = int_to_ptr.vmem [resolvable:$true] %s25
      %28 = dma.hbm_to_vmem [thread:$0]  %s0, 512, %s26, [#allocation3]
    $region5: #{tpu_custom_call.1} parent=1 // pred_fallthru
      _
    // Predicated region
    $region6: #{tpu_custom_call.1} parent=1 // pred_check
      _
    $region7: #{tpu_custom_call.1} parent=1 // pred_check_branch
      %30 = sbr.rel (0) target = $region9
    $region8: #{tpu_custom_call.1} parent=1 // pred_region
      %s32 = ssub.s32 256, 256
      %33 = vsyncadd [#allocation6], %s32
      %s34 = sshll.u32 [#allocation5], 4
      %s35 = int_to_ptr.vmem [resolvable:$true] %s34
      %40 = dma.hbm_to_vmem [thread:$0]  %s1, 256, %s35, [#allocation6], 128, 128, 8
    $region9: #{tpu_custom_call.1} parent=1 // pred_fallthru
      _
    // Predicated region
    $region10: #{tpu_custom_call.1} parent=1 // pred_check
      _
    $region11: #{tpu_custom_call.1} parent=1 // pred_check_branch
      %42 = sbr.rel (0) target = $region13
    $region12: #{tpu_custom_call.1} parent=1 // pred_region
      %s44 = ssub.s32 512, 512
      %45 = vsyncadd [#allocation6], %s44
      %s46 = sshll.u32 [#allocation7], 4
      %s47 = int_to_ptr.vmem [resolvable:$true] %s46
      %52 = dma.hbm_to_vmem [thread:$0]  %s2, 512, %s47, [#allocation6], 128, 128, 8
    $region13: #{tpu_custom_call.1} parent=1 // pred_fallthru
      _
    // Predicated region
    $region14: #{tpu_custom_call.1} parent=1 // pred_check
      _
    $region15: #{tpu_custom_call.1} parent=1 // pred_check_branch
      %54 = sbr.rel (0) target = $region17
    $region16: #{tpu_custom_call.1} parent=1 // pred_region
      _
    $region17: #{tpu_custom_call.1} parent=1 // pred_fallthru
      _
    // Predicated region
    $region18: #{tpu_custom_call.1} parent=1 // pred_check
      _
    $region19: #{tpu_custom_call.1} parent=1 // pred_check_branch
      %56 = sbr.rel (0) target = $region21
    $region20: #{tpu_custom_call.1} parent=1 // pred_region
      %s58 = ssub.s32 512, 512
      %59 = vsyncadd [#allocation9], %s58
      %s60 = sshll.u32 [#allocation8], 4
      %s61 = int_to_ptr.vmem [resolvable:$true] %s60
      %66 = dma.hbm_to_vmem [thread:$0]  %s4, 512, %s61, [#allocation9], 128, 128, 8
    $region21: #{tpu_custom_call.1} parent=1 // pred_fallthru
      _
    // Predicated region
    $region22: #{tpu_custom_call.1} parent=1 // pred_check
      _
    $region23: #{tpu_custom_call.1} parent=1 // pred_check_branch
      %68 = sbr.rel (0) target = $region25
    $region24: #{tpu_custom_call.1} parent=1 // pred_region
      _
    $region25: #{tpu_custom_call.1} parent=1 // pred_fallthru
      _
    // Predicated region
    $region26: #{tpu_custom_call.1} parent=1 // pred_check
      _
    $region27: #{tpu_custom_call.1} parent=1 // pred_check_branch
      %70 = sbr.rel (0) target = $region29
    $region28: #{tpu_custom_call.1} parent=1 // pred_region
      %s72 = ssub.s32 8192, 8192
      %73 = vsyncadd [#allocation9], %s72
      %s74 = sshll.u32 [#allocation10], 4
      %s75 = int_to_ptr.vmem [resolvable:$true] %s74
      %80 = dma.hbm_to_vmem [thread:$0]  %s6, 8192, %s75, [#allocation9], 512, 512, 32
    $region29: #{tpu_custom_call.1} parent=1 // pred_fallthru
      _
    // Predicated region
    $region30: #{tpu_custom_call.1} parent=1 // pred_check
      _
    $region31: #{tpu_custom_call.1} parent=1 // pred_check_branch
      %82 = sbr.rel (0) target = $region33
    $region32: #{tpu_custom_call.1} parent=1 // pred_region
      _
    $region33: #{tpu_custom_call.1} parent=1 // pred_fallthru
      _
    // Predicated region
    $region34: #{tpu_custom_call.1} parent=1 // pred_check
      _
    $region35: #{tpu_custom_call.1} parent=1 // pred_check_branch
      %84 = sbr.rel (0) target = $region37
    $region36: #{tpu_custom_call.1} parent=1 // pred_region
      %s86 = ssub.s32 512, 512
      %87 = vsyncadd [#allocation12], %s86
      %s89 = sshll.u32 [#allocation11], 4
      %s90 = int_to_ptr.vmem [resolvable:$true] %s89
      %92 = dma.hbm_to_vmem [thread:$0]  %s8, 512, %s90, [#allocation12]
    $region37: #{tpu_custom_call.1} parent=1 // pred_fallthru
      _
    // Predicated region
    $region38: #{tpu_custom_call.1} parent=1 // pred_check
      _
    $region39: #{tpu_custom_call.1} parent=1 // pred_check_branch
      %94 = sbr.rel (0) target = $region41
    $region40: #{tpu_custom_call.1} parent=1 // pred_region
      %95 = dma.done [#allocation3], 512
    $region41: #{tpu_custom_call.1} parent=1 // pred_fallthru
      _
    // Predicated region
    $region42: #{tpu_custom_call.1} parent=1 // pred_check
      _
    $region43: #{tpu_custom_call.1} parent=1 // pred_check_branch
      %97 = sbr.rel (0) target = $region45
    $region44: #{tpu_custom_call.1} parent=1 // pred_region
      %98 = dma.done [#allocation6], 256
    $region45: #{tpu_custom_call.1} parent=1 // pred_fallthru
      _
    // Predicated region
    $region46: #{tpu_custom_call.1} parent=1 // pred_check
      _
    $region47: #{tpu_custom_call.1} parent=1 // pred_check_branch
      %100 = sbr.rel (0) target = $region49
    $region48: #{tpu_custom_call.1} parent=1 // pred_region
      %101 = dma.done [#allocation6], 512
    $region49: #{tpu_custom_call.1} parent=1 // pred_fallthru
      _
    // Predicated region
    $region50: #{tpu_custom_call.1} parent=1 // pred_check
      _
    $region51: #{tpu_custom_call.1} parent=1 // pred_check_branch
      %103 = sbr.rel (0) target = $region53
    $region52: #{tpu_custom_call.1} parent=1 // pred_region
      %104 = dma.done [#allocation9], 512
    $region53: #{tpu_custom_call.1} parent=1 // pred_fallthru
      _
    // Predicated region
    $region54: #{tpu_custom_call.1} parent=1 // pred_check
      _
    $region55: #{tpu_custom_call.1} parent=1 // pred_check_branch
      %106 = sbr.rel (0) target = $region57
    $region56: #{tpu_custom_call.1} parent=1 // pred_region
      %107 = dma.done [#allocation9], 8192
    $region57: #{tpu_custom_call.1} parent=1 // pred_fallthru
      _
    // Predicated region
    $region58: #{tpu_custom_call.1} parent=1 // pred_check
      _
    $region59: #{tpu_custom_call.1} parent=1 // pred_check_branch
      %109 = sbr.rel (0) target = $region61
    $region60: #{tpu_custom_call.1} parent=1 // pred_region
      %110 = dma.done [#allocation12], 512
    $region61: #{tpu_custom_call.1} parent=1 // pred_fallthru
      _
    %v111 = vld [vmem:[#allocation5] sm:$0xff]
    %v112 = vld [vmem:[#allocation5 + $0x8] sm:$0xff]
    %v113 = vld [vmem:[#allocation10] sm:$0xff]
    %v114 = vld [vmem:[#allocation10 + $0x8] sm:$0xff]
    %v115 = vld [vmem:[#allocation10 + $0x10] sm:$0xff]
    %v116 = vld [vmem:[#allocation10 + $0x18] sm:$0xff]
    %v117 = vld [vmem:[#allocation10 + $0x20] sm:$0xff]
    %v118 = vld [vmem:[#allocation10 + $0x28] sm:$0xff]
    %v119 = vld [vmem:[#allocation10 + $0x30] sm:$0xff]
    %v120 = vld [vmem:[#allocation10 + $0x38] sm:$0xff]
    %v121 = vld [vmem:[#allocation10 + $0x40] sm:$0xff]
    %v122 = vld [vmem:[#allocation10 + $0x48] sm:$0xff]
    %v123 = vld [vmem:[#allocation10 + $0x50] sm:$0xff]
    %v124 = vld [vmem:[#allocation10 + $0x58] sm:$0xff]
    %v125 = vld [vmem:[#allocation10 + $0x60] sm:$0xff]
    %v126 = vld [vmem:[#allocation10 + $0x68] sm:$0xff]
    %v127 = vld [vmem:[#allocation10 + $0x70] sm:$0xff]
    %v128 = vld [vmem:[#allocation10 + $0x78] sm:$0xff]
    %v129 = vld [vmem:[#allocation10 + $0x80] sm:$0xff]
    %v130 = vld [vmem:[#allocation10 + $0x88] sm:$0xff]
    %v131 = vld [vmem:[#allocation10 + $0x90] sm:$0xff]
    %v132 = vld [vmem:[#allocation10 + $0x98] sm:$0xff]
    %v133 = vld [vmem:[#allocation10 + $0xa0] sm:$0xff]
    %v134 = vld [vmem:[#allocation10 + $0xa8] sm:$0xff]
    %v135 = vld [vmem:[#allocation10 + $0xb0] sm:$0xff]
    %v136 = vld [vmem:[#allocation10 + $0xb8] sm:$0xff]
    %v137 = vld [vmem:[#allocation10 + $0xc0] sm:$0xff]
    %v138 = vld [vmem:[#allocation10 + $0xc8] sm:$0xff]
    %v139 = vld [vmem:[#allocation10 + $0xd0] sm:$0xff]
    %v140 = vld [vmem:[#allocation10 + $0xd8] sm:$0xff]
    %v141 = vld [vmem:[#allocation10 + $0xe0] sm:$0xff]
    %v142 = vld [vmem:[#allocation10 + $0xe8] sm:$0xff]
    %v143 = vld [vmem:[#allocation10 + $0xf0] sm:$0xff]
    %v144 = vld [vmem:[#allocation10 + $0xf8] sm:$0xff]
    %v145 = vld [vmem:[#allocation10 + $0x100] sm:$0xff]
    %v146 = vld [vmem:[#allocation10 + $0x108] sm:$0xff]
    %v147 = vld [vmem:[#allocation10 + $0x110] sm:$0xff]
    %v148 = vld [vmem:[#allocation10 + $0x118] sm:$0xff]
    %v149 = vld [vmem:[#allocation10 + $0x120] sm:$0xff]
    %v150 = vld [vmem:[#allocation10 + $0x128] sm:$0xff]
    %v151 = vld [vmem:[#allocation10 + $0x130] sm:$0xff]
    %v152 = vld [vmem:[#allocation10 + $0x138] sm:$0xff]
    %v153 = vld [vmem:[#allocation10 + $0x140] sm:$0xff]
    %v154 = vld [vmem:[#allocation10 + $0x148] sm:$0xff]
    %v155 = vld [vmem:[#allocation10 + $0x150] sm:$0xff]
    %v156 = vld [vmem:[#allocation10 + $0x158] sm:$0xff]
    %v157 = vld [vmem:[#allocation10 + $0x160] sm:$0xff]
    %v158 = vld [vmem:[#allocation10 + $0x168] sm:$0xff]
    %v159 = vld [vmem:[#allocation10 + $0x170] sm:$0xff]
    %v160 = vld [vmem:[#allocation10 + $0x178] sm:$0xff]
    %v161 = vld [vmem:[#allocation10 + $0x180] sm:$0xff]
    %v162 = vld [vmem:[#allocation10 + $0x188] sm:$0xff]
    %v163 = vld [vmem:[#allocation10 + $0x190] sm:$0xff]
    %v164 = vld [vmem:[#allocation10 + $0x198] sm:$0xff]
    %v165 = vld [vmem:[#allocation10 + $0x1a0] sm:$0xff]
    %v166 = vld [vmem:[#allocation10 + $0x1a8] sm:$0xff]
    %v167 = vld [vmem:[#allocation10 + $0x1b0] sm:$0xff]
    %v168 = vld [vmem:[#allocation10 + $0x1b8] sm:$0xff]
    %v169 = vld [vmem:[#allocation10 + $0x1c0] sm:$0xff]
    %v170 = vld [vmem:[#allocation10 + $0x1c8] sm:$0xff]
    %v171 = vld [vmem:[#allocation10 + $0x1d0] sm:$0xff]
    %v172 = vld [vmem:[#allocation10 + $0x1d8] sm:$0xff]
    %v173 = vld [vmem:[#allocation10 + $0x1e0] sm:$0xff]
    %v174 = vld [vmem:[#allocation10 + $0x1e8] sm:$0xff]
    %v175 = vld [vmem:[#allocation10 + $0x1f0] sm:$0xff]
    %v176 = vld [vmem:[#allocation10 + $0x1f8] sm:$0xff]
    %177 = vmatprep.subr.mxu0 %v114
    %178 = vmatpush1.msra.mxu0 %v113
    %179 = vmatprep.subr.mxu0 %v118
    %180 = vmatpush1.msra.mxu0 %v117
    %181 = vmatprep.subr.mxu0 %v122
    %182 = vmatpush1.msra.mxu0 %v121
    %183 = vmatprep.subr.mxu0 %v126
    %184 = vmatpush1.msra.mxu0 %v125
    %185 = vmatprep.subr.mxu0 %v130
    %186 = vmatpush1.msra.mxu0 %v129
    %187 = vmatprep.subr.mxu0 %v134
    %188 = vmatpush1.msra.mxu0 %v133
    %189 = vmatprep.subr.mxu0 %v138
    %190 = vmatpush1.msra.mxu0 %v137
    %191 = vmatprep.subr.mxu0 %v142
    %192 = vmatpush1.msra.mxu0 %v141
    %193 = vmatprep.subr.mxu0 %v146
    %194 = vmatpush1.msra.mxu0 %v145
    %195 = vmatprep.subr.mxu0 %v150
    %196 = vmatpush1.msra.mxu0 %v149
    %197 = vmatprep.subr.mxu0 %v154
    %198 = vmatpush1.msra.mxu0 %v153
    %199 = vmatprep.subr.mxu0 %v158
    %200 = vmatpush1.msra.mxu0 %v157
    %201 = vmatprep.subr.mxu0 %v162
    %202 = vmatpush1.msra.mxu0 %v161
    %203 = vmatprep.subr.mxu0 %v166
    %204 = vmatpush1.msra.mxu0 %v165
    %205 = vmatprep.subr.mxu0 %v170
    %206 = vmatpush1.msra.mxu0 %v169
    %207 = vmatprep.subr.mxu0 %v174
    %208 = vmatpush1.msra.mxu0 %v173
    %209 = vmatprep.subr.mxu0 0.0
    %210 = vmatpush1.msra.mxu0 0.0
    %211 = vmatprep.subr.mxu0 0.0
    %212 = vmatpush1.msra.mxu0 0.0
    %213 = vmatprep.subr.mxu0 0.0
    %214 = vmatpush1.msra.mxu0 0.0
    %215 = vmatprep.subr.mxu0 0.0
    %216 = vmatpush1.msra.mxu0 0.0
    %217 = vmatprep.subr.mxu0 0.0
    %218 = vmatpush1.msra.mxu0 0.0
    %219 = vmatprep.subr.mxu0 0.0
    %220 = vmatpush1.msra.mxu0 0.0
    %221 = vmatprep.subr.mxu0 0.0
    %222 = vmatpush1.msra.mxu0 0.0
    %223 = vmatprep.subr.mxu0 0.0
    %224 = vmatpush1.msra.mxu0 0.0
    %225 = vmatprep.subr.mxu0 0.0
    %226 = vmatpush1.msra.mxu0 0.0
    %227 = vmatprep.subr.mxu0 0.0
    %228 = vmatpush1.msra.mxu0 0.0
    %229 = vmatprep.subr.mxu0 0.0
    %230 = vmatpush1.msra.mxu0 0.0
    %231 = vmatprep.subr.mxu0 0.0
    %232 = vmatpush1.msra.mxu0 0.0
    %233 = vmatprep.subr.mxu0 0.0
    %234 = vmatpush1.msra.mxu0 0.0
    %235 = vmatprep.subr.mxu0 0.0
    %236 = vmatpush1.msra.mxu0 0.0
    %237 = vmatprep.subr.mxu0 0.0
    %238 = vmatpush1.msra.mxu0 0.0
    %239 = vmatprep.subr.mxu0 0.0
    %240 = vmatpush1.msra.mxu0 0.0
    %241 = vmatprep.mubr.f32.mxu0 0.0
    %242 = vmatmul.mubr.f32.gmra.mrb[0].mxu0 %v111
    %v243 = vpop.f32.mrb[0].mxu0
    %v244 = vadd.f32 0.0, %v243
    %v245 = vpop.f32.mrb[0].mxu0
    %v246 = vadd.f32 0.0, %v245
    %247 = vmatprep.mubr.f32.mxu0 0.0
    %248 = vmatmul.mubr.f32.gmra.mrb[0].mxu0 %v112
    %v249 = vpop.f32.mrb[0].mxu0
    %v250 = vadd.f32 0.0, %v249
    %v251 = vpop.f32.mrb[0].mxu0
    %v252 = vadd.f32 0.0, %v251
    %253 = vdwg.mxu0
    %254 = vmatprep.subr.mxu0 %v116
    %255 = vmatpush1.msra.mxu0 %v115
    %256 = vmatprep.subr.mxu0 %v120
    %257 = vmatpush1.msra.mxu0 %v119
    %258 = vmatprep.subr.mxu0 %v124
    %259 = vmatpush1.msra.mxu0 %v123
    %260 = vmatprep.subr.mxu0 %v128
    %261 = vmatpush1.msra.mxu0 %v127
    %262 = vmatprep.subr.mxu0 %v132
    %263 = vmatpush1.msra.mxu0 %v131
    %264 = vmatprep.subr.mxu0 %v136
    %265 = vmatpush1.msra.mxu0 %v135
    %266 = vmatprep.subr.mxu0 %v140
    %267 = vmatpush1.msra.mxu0 %v139
    %268 = vmatprep.subr.mxu0 %v144
    %269 = vmatpush1.msra.mxu0 %v143
    %270 = vmatprep.subr.mxu0 %v148
    %271 = vmatpush1.msra.mxu0 %v147
    %272 = vmatprep.subr.mxu0 %v152
    %273 = vmatpush1.msra.mxu0 %v151
    %274 = vmatprep.subr.mxu0 %v156
    %275 = vmatpush1.msra.mxu0 %v155
    %276 = vmatprep.subr.mxu0 %v160
    %277 = vmatpush1.msra.mxu0 %v159
    %278 = vmatprep.subr.mxu0 %v164
    %279 = vmatpush1.msra.mxu0 %v163
    %280 = vmatprep.subr.mxu0 %v168
    %281 = vmatpush1.msra.mxu0 %v167
    %282 = vmatprep.subr.mxu0 %v172
    %283 = vmatpush1.msra.mxu0 %v171
    %284 = vmatprep.subr.mxu0 %v176
    %285 = vmatpush1.msra.mxu0 %v175
    %286 = vmatprep.subr.mxu0 0.0
    %287 = vmatpush1.msra.mxu0 0.0
    %288 = vmatprep.subr.mxu0 0.0
    %289 = vmatpush1.msra.mxu0 0.0
    %290 = vmatprep.subr.mxu0 0.0
    %291 = vmatpush1.msra.mxu0 0.0
    %292 = vmatprep.subr.mxu0 0.0
    %293 = vmatpush1.msra.mxu0 0.0
    %294 = vmatprep.subr.mxu0 0.0
    %295 = vmatpush1.msra.mxu0 0.0
    %296 = vmatprep.subr.mxu0 0.0
    %297 = vmatpush1.msra.mxu0 0.0
    %298 = vmatprep.subr.mxu0 0.0
    %299 = vmatpush1.msra.mxu0 0.0
    %300 = vmatprep.subr.mxu0 0.0
    %301 = vmatpush1.msra.mxu0 0.0
    %302 = vmatprep.subr.mxu0 0.0
    %303 = vmatpush1.msra.mxu0 0.0
    %304 = vmatprep.subr.mxu0 0.0
    %305 = vmatpush1.msra.mxu0 0.0
    %306 = vmatprep.subr.mxu0 0.0
    %307 = vmatpush1.msra.mxu0 0.0
    %308 = vmatprep.subr.mxu0 0.0
    %309 = vmatpush1.msra.mxu0 0.0
    %310 = vmatprep.subr.mxu0 0.0
    %311 = vmatpush1.msra.mxu0 0.0
    %312 = vmatprep.subr.mxu0 0.0
    %313 = vmatpush1.msra.mxu0 0.0
    %314 = vmatprep.subr.mxu0 0.0
    %315 = vmatpush1.msra.mxu0 0.0
    %316 = vmatprep.subr.mxu0 0.0
    %317 = vmatpush1.msra.mxu0 0.0
    %318 = vmatprep.mubr.f32.mxu0 0.0
    %319 = vmatmul.mubr.f32.gmra.mrb[0].mxu0 %v111
    %v320 = vpop.f32.mrb[0].mxu0
    %v321 = vadd.f32 0.0, %v320
    %v322 = vpop.f32.mrb[0].mxu0
    %v323 = vadd.f32 0.0, %v322
    %324 = vmatprep.mubr.f32.mxu0 0.0
    %325 = vmatmul.mubr.f32.gmra.mrb[0].mxu0 %v112
    %v326 = vpop.f32.mrb[0].mxu0
    %v327 = vadd.f32 0.0, %v326
    %v328 = vpop.f32.mrb[0].mxu0
    %v329 = vadd.f32 0.0, %v328
    %330 = vdwg.mxu0
    %v331 = vld [vmem:[#allocation7] sm:$0xff]
    %v332 = vld [vmem:[#allocation7 + $0x8] sm:$0xff]
    %v333 = vld [vmem:[#allocation7 + $0x10] sm:$0xff]
    %v334 = vld [vmem:[#allocation7 + $0x18] sm:$0xff]
    %v335 = vld [vmem:[%s7] sm:$0xff]
    %v336 = vld [vmem:[%s7 + $0x8] sm:$0xff]
    %v337 = vld [vmem:[%s7 + $0x10] sm:$0xff]
    %v338 = vld [vmem:[%s7 + $0x18] sm:$0xff]
    %v339 = vld [vmem:[%s7 + $0x20] sm:$0xff]
    %v340 = vld [vmem:[%s7 + $0x28] sm:$0xff]
    %v341 = vld [vmem:[%s7 + $0x30] sm:$0xff]
    %v342 = vld [vmem:[%s7 + $0x38] sm:$0xff]
    %v343 = vld [vmem:[%s7 + $0x40] sm:$0xff]
    %v344 = vld [vmem:[%s7 + $0x48] sm:$0xff]
    %v345 = vld [vmem:[%s7 + $0x50] sm:$0xff]
    %v346 = vld [vmem:[%s7 + $0x58] sm:$0xff]
    %v347 = vld [vmem:[%s7 + $0x60] sm:$0xff]
    %v348 = vld [vmem:[%s7 + $0x68] sm:$0xff]
    %v349 = vld [vmem:[%s7 + $0x70] sm:$0xff]
    %v350 = vld [vmem:[%s7 + $0x78] sm:$0xff]
    %vm351 = vcmask 261120
    %v353 = vsel %vm351, %v331, 0
    %v356 = vsel %vm351, %v332, 0
    %v359 = vsel %vm351, %v333, 0
    %v362 = vsel %vm351, %v334, 0
    %364 = vmatprep.subr.mxu0 %v336
    %365 = vmatpush1.msra.mxu0 %v335
    %366 = vmatprep.subr.mxu0 %v340
    %367 = vmatpush1.msra.mxu0 %v339
    %368 = vmatprep.subr.mxu0 %v344
    %369 = vmatpush1.msra.mxu0 %v343
    %370 = vmatprep.subr.mxu0 %v348
    %371 = vmatpush1.msra.mxu0 %v347
    %372 = vmatprep.subr.mxu0 0.0
    %373 = vmatpush1.msra.mxu0 0.0
    %374 = vmatprep.subr.mxu0 0.0
    %375 = vmatpush1.msra.mxu0 0.0
    %376 = vmatprep.subr.mxu0 0.0
    %377 = vmatpush1.msra.mxu0 0.0
    %378 = vmatprep.subr.mxu0 0.0
    %379 = vmatpush1.msra.mxu0 0.0
    %380 = vmatprep.subr.mxu0 0.0
    %381 = vmatpush1.msra.mxu0 0.0
    %382 = vmatprep.subr.mxu0 0.0
    %383 = vmatpush1.msra.mxu0 0.0
    %384 = vmatprep.subr.mxu0 0.0
    %385 = vmatpush1.msra.mxu0 0.0
    %386 = vmatprep.subr.mxu0 0.0
    %387 = vmatpush1.msra.mxu0 0.0
    %388 = vmatprep.subr.mxu0 0.0
    %389 = vmatpush1.msra.mxu0 0.0
    %390 = vmatprep.subr.mxu0 0.0
    %391 = vmatpush1.msra.mxu0 0.0
    %392 = vmatprep.subr.mxu0 0.0
    %393 = vmatpush1.msra.mxu0 0.0
    %394 = vmatprep.subr.mxu0 0.0
    %395 = vmatpush1.msra.mxu0 0.0
    %396 = vmatprep.subr.mxu0 0.0
    %397 = vmatpush1.msra.mxu0 0.0
    %398 = vmatprep.subr.mxu0 0.0
    %399 = vmatpush1.msra.mxu0 0.0
    %400 = vmatprep.subr.mxu0 0.0
    %401 = vmatpush1.msra.mxu0 0.0
    %402 = vmatprep.subr.mxu0 0.0
    %403 = vmatpush1.msra.mxu0 0.0
    %404 = vmatprep.subr.mxu0 0.0
    %405 = vmatpush1.msra.mxu0 0.0
    %406 = vmatprep.subr.mxu0 0.0
    %407 = vmatpush1.msra.mxu0 0.0
    %408 = vmatprep.subr.mxu0 0.0
    %409 = vmatpush1.msra.mxu0 0.0
    %410 = vmatprep.subr.mxu0 0.0
    %411 = vmatpush1.msra.mxu0 0.0
    %412 = vmatprep.subr.mxu0 0.0
    %413 = vmatpush1.msra.mxu0 0.0
    %414 = vmatprep.subr.mxu0 0.0
    %415 = vmatpush1.msra.mxu0 0.0
    %416 = vmatprep.subr.mxu0 0.0
    %417 = vmatpush1.msra.mxu0 0.0
    %418 = vmatprep.subr.mxu0 0.0
    %419 = vmatpush1.msra.mxu0 0.0
    %420 = vmatprep.subr.mxu0 0.0
    %421 = vmatpush1.msra.mxu0 0.0
    %422 = vmatprep.subr.mxu0 0.0
    %423 = vmatpush1.msra.mxu0 0.0
    %424 = vmatprep.subr.mxu0 0.0
    %425 = vmatpush1.msra.mxu0 0.0
    %426 = vmatprep.subr.mxu0 0.0
    %427 = vmatpush1.msra.mxu0 0.0
    %428 = vmatprep.mubr.f32.mxu0 0.0
    %429 = vmatmul.mubr.f32.gmra.mrb[0].mxu0 %v353
    %v430 = vpop.f32.mrb[0].mxu0
    %v431 = vadd.f32 0.0, %v430
    %v432 = vpop.f32.mrb[0].mxu0
    %v433 = vadd.f32 0.0, %v432
    %434 = vmatprep.mubr.f32.mxu0 0.0
    %435 = vmatmul.mubr.f32.gmra.mrb[0].mxu0 %v356
    %v436 = vpop.f32.mrb[0].mxu0
    %v437 = vadd.f32 0.0, %v436
    %v438 = vpop.f32.mrb[0].mxu0
    %v439 = vadd.f32 0.0, %v438
    %440 = vmatprep.mubr.f32.mxu0 0.0
    %441 = vmatmul.mubr.f32.gmra.mrb[0].mxu0 %v359
    %v442 = vpop.f32.mrb[0].mxu0
    %v443 = vadd.f32 0.0, %v442
    %v444 = vpop.f32.mrb[0].mxu0
    %v445 = vadd.f32 0.0, %v444
    %446 = vmatprep.mubr.f32.mxu0 0.0
    %447 = vmatmul.mubr.f32.gmra.mrb[0].mxu0 %v362
    %v448 = vpop.f32.mrb[0].mxu0
    %v449 = vadd.f32 0.0, %v448
    %v450 = vpop.f32.mrb[0].mxu0
    %v451 = vadd.f32 0.0, %v450
    %452 = vdwg.mxu0
    %453 = vmatprep.subr.mxu0 %v338
    %454 = vmatpush1.msra.mxu0 %v337
    %455 = vmatprep.subr.mxu0 %v342
    %456 = vmatpush1.msra.mxu0 %v341
    %457 = vmatprep.subr.mxu0 %v346
    %458 = vmatpush1.msra.mxu0 %v345
    %459 = vmatprep.subr.mxu0 %v350
    %460 = vmatpush1.msra.mxu0 %v349
    %461 = vmatprep.subr.mxu0 0.0
    %462 = vmatpush1.msra.mxu0 0.0
    %463 = vmatprep.subr.mxu0 0.0
    %464 = vmatpush1.msra.mxu0 0.0
    %465 = vmatprep.subr.mxu0 0.0
    %466 = vmatpush1.msra.mxu0 0.0
    %467 = vmatprep.subr.mxu0 0.0
    %468 = vmatpush1.msra.mxu0 0.0
    %469 = vmatprep.subr.mxu0 0.0
    %470 = vmatpush1.msra.mxu0 0.0
    %471 = vmatprep.subr.mxu0 0.0
    %472 = vmatpush1.msra.mxu0 0.0
    %473 = vmatprep.subr.mxu0 0.0
    %474 = vmatpush1.msra.mxu0 0.0
    %475 = vmatprep.subr.mxu0 0.0
    %476 = vmatpush1.msra.mxu0 0.0
    %477 = vmatprep.subr.mxu0 0.0
    %478 = vmatpush1.msra.mxu0 0.0
    %479 = vmatprep.subr.mxu0 0.0
    %480 = vmatpush1.msra.mxu0 0.0
    %481 = vmatprep.subr.mxu0 0.0
    %482 = vmatpush1.msra.mxu0 0.0
    %483 = vmatprep.subr.mxu0 0.0
    %484 = vmatpush1.msra.mxu0 0.0
    %485 = vmatprep.subr.mxu0 0.0
    %486 = vmatpush1.msra.mxu0 0.0
    %487 = vmatprep.subr.mxu0 0.0
    %488 = vmatpush1.msra.mxu0 0.0
    %489 = vmatprep.subr.mxu0 0.0
    %490 = vmatpush1.msra.mxu0 0.0
    %491 = vmatprep.subr.mxu0 0.0
    %492 = vmatpush1.msra.mxu0 0.0
    %493 = vmatprep.subr.mxu0 0.0
    %494 = vmatpush1.msra.mxu0 0.0
    %495 = vmatprep.subr.mxu0 0.0
    %496 = vmatpush1.msra.mxu0 0.0
    %497 = vmatprep.subr.mxu0 0.0
    %498 = vmatpush1.msra.mxu0 0.0
    %499 = vmatprep.subr.mxu0 0.0
    %500 = vmatpush1.msra.mxu0 0.0
    %501 = vmatprep.subr.mxu0 0.0
    %502 = vmatpush1.msra.mxu0 0.0
    %503 = vmatprep.subr.mxu0 0.0
    %504 = vmatpush1.msra.mxu0 0.0
    %505 = vmatprep.subr.mxu0 0.0
    %506 = vmatpush1.msra.mxu0 0.0
    %507 = vmatprep.subr.mxu0 0.0
    %508 = vmatpush1.msra.mxu0 0.0
    %509 = vmatprep.subr.mxu0 0.0
    %510 = vmatpush1.msra.mxu0 0.0
    %511 = vmatprep.subr.mxu0 0.0
    %512 = vmatpush1.msra.mxu0 0.0
    %513 = vmatprep.subr.mxu0 0.0
    %514 = vmatpush1.msra.mxu0 0.0
    %515 = vmatprep.subr.mxu0 0.0
    %516 = vmatpush1.msra.mxu0 0.0
    %517 = vmatprep.mubr.f32.mxu0 0.0
    %518 = vmatmul.mubr.f32.gmra.mrb[0].mxu0 %v353
    %v519 = vpop.f32.mrb[0].mxu0
    %v520 = vadd.f32 0.0, %v519
    %v521 = vpop.f32.mrb[0].mxu0
    %v522 = vadd.f32 0.0, %v521
    %523 = vmatprep.mubr.f32.mxu0 0.0
    %524 = vmatmul.mubr.f32.gmra.mrb[0].mxu0 %v356
    %v525 = vpop.f32.mrb[0].mxu0
    %v526 = vadd.f32 0.0, %v525
    %v527 = vpop.f32.mrb[0].mxu0
    %v528 = vadd.f32 0.0, %v527
    %529 = vmatprep.mubr.f32.mxu0 0.0
    %530 = vmatmul.mubr.f32.gmra.mrb[0].mxu0 %v359
    %v531 = vpop.f32.mrb[0].mxu0
    %v532 = vadd.f32 0.0, %v531
    %v533 = vpop.f32.mrb[0].mxu0
    %v534 = vadd.f32 0.0, %v533
    %535 = vmatprep.mubr.f32.mxu0 0.0
    %536 = vmatmul.mubr.f32.gmra.mrb[0].mxu0 %v362
    %v537 = vpop.f32.mrb[0].mxu0
    %v538 = vadd.f32 0.0, %v537
    %v539 = vpop.f32.mrb[0].mxu0
    %v540 = vadd.f32 0.0, %v539
    %541 = vdwg.mxu0
    %v542 = vld [vmem:[%s3] sm:$0xff]
    %v543 = vld [vmem:[%s3 + $0x8] sm:$0xff]
    %v544 = vld [vmem:[%s3 + $0x10] sm:$0xff]
    %v545 = vld [vmem:[%s3 + $0x18] sm:$0xff]
    %v546 = vld [vmem:[%s3 + $0x20] sm:$0xff]
    %v547 = vld [vmem:[%s3 + $0x28] sm:$0xff]
    %v548 = vld [vmem:[%s3 + $0x30] sm:$0xff]
    %v549 = vld [vmem:[%s3 + $0x38] sm:$0xff]
    %v550 = vld [vmem:[#allocation11] sm:$0xff]
    %v551 = vld [vmem:[#allocation11 + $0x8] sm:$0xff]
    %v552 = vld [vmem:[#allocation11 + $0x10] sm:$0xff]
    %v553 = vld [vmem:[#allocation11 + $0x18] sm:$0xff]
    %vm554 = vcmask 64512
    %v556 = vsel %vm554, %v542, 0
    %v559 = vsel %vm554, %v543, 0
    %v562 = vsel %vm554, %v544, 0
    %v565 = vsel %vm554, %v545, 0
    %v568 = vsel %vm554, %v546, 0
    %v571 = vsel %vm554, %v547, 0
    %v574 = vsel %vm554, %v548, 0
    %v577 = vsel %vm554, %v549, 0
    %579 = vmatprep.subr.mxu0 %v551
    %580 = vmatpush1.msra.mxu0 %v550
    %581 = vmatprep.subr.mxu0 0.0
    %582 = vmatpush1.msra.mxu0 0.0
    %583 = vmatprep.subr.mxu0 0.0
    %584 = vmatpush1.msra.mxu0 0.0
    %585 = vmatprep.subr.mxu0 0.0
    %586 = vmatpush1.msra.mxu0 0.0
    %587 = vmatprep.subr.mxu0 0.0
    %588 = vmatpush1.msra.mxu0 0.0
    %589 = vmatprep.subr.mxu0 0.0
    %590 = vmatpush1.msra.mxu0 0.0
    %591 = vmatprep.subr.mxu0 0.0
    %592 = vmatpush1.msra.mxu0 0.0
    %593 = vmatprep.subr.mxu0 0.0
    %594 = vmatpush1.msra.mxu0 0.0
    %595 = vmatprep.subr.mxu0 0.0
    %596 = vmatpush1.msra.mxu0 0.0
    %597 = vmatprep.subr.mxu0 0.0
    %598 = vmatpush1.msra.mxu0 0.0
    %599 = vmatprep.subr.mxu0 0.0
    %600 = vmatpush1.msra.mxu0 0.0
    %601 = vmatprep.subr.mxu0 0.0
    %602 = vmatpush1.msra.mxu0 0.0
    %603 = vmatprep.subr.mxu0 0.0
    %604 = vmatpush1.msra.mxu0 0.0
    %605 = vmatprep.subr.mxu0 0.0
    %606 = vmatpush1.msra.mxu0 0.0
    %607 = vmatprep.subr.mxu0 0.0
    %608 = vmatpush1.msra.mxu0 0.0
    %609 = vmatprep.subr.mxu0 0.0
    %610 = vmatpush1.msra.mxu0 0.0
    %611 = vmatprep.subr.mxu0 0.0
    %612 = vmatpush1.msra.mxu0 0.0
    %613 = vmatprep.subr.mxu0 0.0
    %614 = vmatpush1.msra.mxu0 0.0
    %615 = vmatprep.subr.mxu0 0.0
    %616 = vmatpush1.msra.mxu0 0.0
    %617 = vmatprep.subr.mxu0 0.0
    %618 = vmatpush1.msra.mxu0 0.0
    %619 = vmatprep.subr.mxu0 0.0
    %620 = vmatpush1.msra.mxu0 0.0
    %621 = vmatprep.subr.mxu0 0.0
    %622 = vmatpush1.msra.mxu0 0.0
    %623 = vmatprep.subr.mxu0 0.0
    %624 = vmatpush1.msra.mxu0 0.0
    %625 = vmatprep.subr.mxu0 0.0
    %626 = vmatpush1.msra.mxu0 0.0
    %627 = vmatprep.subr.mxu0 0.0
    %628 = vmatpush1.msra.mxu0 0.0
    %629 = vmatprep.subr.mxu0 0.0
    %630 = vmatpush1.msra.mxu0 0.0
    %631 = vmatprep.subr.mxu0 0.0
    %632 = vmatpush1.msra.mxu0 0.0
    %633 = vmatprep.subr.mxu0 0.0
    %634 = vmatpush1.msra.mxu0 0.0
    %635 = vmatprep.subr.mxu0 0.0
    %636 = vmatpush1.msra.mxu0 0.0
    %637 = vmatprep.subr.mxu0 0.0
    %638 = vmatpush1.msra.mxu0 0.0
    %639 = vmatprep.subr.mxu0 0.0
    %640 = vmatpush1.msra.mxu0 0.0
    %641 = vmatprep.subr.mxu0 0.0
    %642 = vmatpush1.msra.mxu0 0.0
    %643 = vmatprep.mubr.f32.mxu0 0.0
    %644 = vmatmul.mubr.f32.gmra.mrb[0].mxu0 %v556
    %v645 = vpop.f32.mrb[0].mxu0
    %v646 = vadd.f32 0.0, %v645
    %v647 = vpop.f32.mrb[0].mxu0
    %v648 = vadd.f32 0.0, %v647
    %649 = vmatprep.mubr.f32.mxu0 0.0
    %650 = vmatmul.mubr.f32.gmra.mrb[0].mxu0 %v559
    %v651 = vpop.f32.mrb[0].mxu0
    %v652 = vadd.f32 0.0, %v651
    %v653 = vpop.f32.mrb[0].mxu0
    %v654 = vadd.f32 0.0, %v653
    %655 = vmatprep.mubr.f32.mxu0 0.0
    %656 = vmatmul.mubr.f32.gmra.mrb[0].mxu0 %v562
    %v657 = vpop.f32.mrb[0].mxu0
    %v658 = vadd.f32 0.0, %v657
    %v659 = vpop.f32.mrb[0].mxu0
    %v660 = vadd.f32 0.0, %v659
    %661 = vmatprep.mubr.f32.mxu0 0.0
    %662 = vmatmul.mubr.f32.gmra.mrb[0].mxu0 %v565
    %v663 = vpop.f32.mrb[0].mxu0
    %v664 = vadd.f32 0.0, %v663
    %v665 = vpop.f32.mrb[0].mxu0
    %v666 = vadd.f32 0.0, %v665
    %667 = vmatprep.mubr.f32.mxu0 0.0
    %668 = vmatmul.mubr.f32.gmra.mrb[0].mxu0 %v568
    %v669 = vpop.f32.mrb[0].mxu0
    %v670 = vadd.f32 0.0, %v669
    %v671 = vpop.f32.mrb[0].mxu0
    %v672 = vadd.f32 0.0, %v671
    %673 = vmatprep.mubr.f32.mxu0 0.0
    %674 = vmatmul.mubr.f32.gmra.mrb[0].mxu0 %v571
    %v675 = vpop.f32.mrb[0].mxu0
    %v676 = vadd.f32 0.0, %v675
    %v677 = vpop.f32.mrb[0].mxu0
    %v678 = vadd.f32 0.0, %v677
    %679 = vmatprep.mubr.f32.mxu0 0.0
    %680 = vmatmul.mubr.f32.gmra.mrb[0].mxu0 %v574
    %v681 = vpop.f32.mrb[0].mxu0
    %v682 = vadd.f32 0.0, %v681
    %v683 = vpop.f32.mrb[0].mxu0
    %v684 = vadd.f32 0.0, %v683
    %685 = vmatprep.mubr.f32.mxu0 0.0
    %686 = vmatmul.mubr.f32.gmra.mrb[0].mxu0 %v577
    %v687 = vpop.f32.mrb[0].mxu0
    %v688 = vadd.f32 0.0, %v687
    %v689 = vpop.f32.mrb[0].mxu0
    %v690 = vadd.f32 0.0, %v689
    %691 = vdwg.mxu0
    %692 = vmatprep.subr.mxu0 %v553
    %693 = vmatpush1.msra.mxu0 %v552
    %694 = vmatprep.subr.mxu0 0.0
    %695 = vmatpush1.msra.mxu0 0.0
    %696 = vmatprep.subr.mxu0 0.0
    %697 = vmatpush1.msra.mxu0 0.0
    %698 = vmatprep.subr.mxu0 0.0
    %699 = vmatpush1.msra.mxu0 0.0
    %700 = vmatprep.subr.mxu0 0.0
    %701 = vmatpush1.msra.mxu0 0.0
    %702 = vmatprep.subr.mxu0 0.0
    %703 = vmatpush1.msra.mxu0 0.0
    %704 = vmatprep.subr.mxu0 0.0
    %705 = vmatpush1.msra.mxu0 0.0
    %706 = vmatprep.subr.mxu0 0.0
    %707 = vmatpush1.msra.mxu0 0.0
    %708 = vmatprep.subr.mxu0 0.0
    %709 = vmatpush1.msra.mxu0 0.0
    %710 = vmatprep.subr.mxu0 0.0
    %711 = vmatpush1.msra.mxu0 0.0
    %712 = vmatprep.subr.mxu0 0.0
    %713 = vmatpush1.msra.mxu0 0.0
    %714 = vmatprep.subr.mxu0 0.0
    %715 = vmatpush1.msra.mxu0 0.0
    %716 = vmatprep.subr.mxu0 0.0
    %717 = vmatpush1.msra.mxu0 0.0
    %718 = vmatprep.subr.mxu0 0.0
    %719 = vmatpush1.msra.mxu0 0.0
    %720 = vmatprep.subr.mxu0 0.0
    %721 = vmatpush1.msra.mxu0 0.0
    %722 = vmatprep.subr.mxu0 0.0
    %723 = vmatpush1.msra.mxu0 0.0
    %724 = vmatprep.subr.mxu0 0.0
    %725 = vmatpush1.msra.mxu0 0.0
    %726 = vmatprep.subr.mxu0 0.0
    %727 = vmatpush1.msra.mxu0 0.0
    %728 = vmatprep.subr.mxu0 0.0
    %729 = vmatpush1.msra.mxu0 0.0
    %730 = vmatprep.subr.mxu0 0.0
    %731 = vmatpush1.msra.mxu0 0.0
    %732 = vmatprep.subr.mxu0 0.0
    %733 = vmatpush1.msra.mxu0 0.0
    %734 = vmatprep.subr.mxu0 0.0
    %735 = vmatpush1.msra.mxu0 0.0
    %736 = vmatprep.subr.mxu0 0.0
    %737 = vmatpush1.msra.mxu0 0.0
    %738 = vmatprep.subr.mxu0 0.0
    %739 = vmatpush1.msra.mxu0 0.0
    %740 = vmatprep.subr.mxu0 0.0
    %741 = vmatpush1.msra.mxu0 0.0
    %742 = vmatprep.subr.mxu0 0.0
    %743 = vmatpush1.msra.mxu0 0.0
    %744 = vmatprep.subr.mxu0 0.0
    %745 = vmatpush1.msra.mxu0 0.0
    %746 = vmatprep.subr.mxu0 0.0
    %747 = vmatpush1.msra.mxu0 0.0
    %748 = vmatprep.subr.mxu0 0.0
    %749 = vmatpush1.msra.mxu0 0.0
    %750 = vmatprep.subr.mxu0 0.0
    %751 = vmatpush1.msra.mxu0 0.0
    %752 = vmatprep.subr.mxu0 0.0
    %753 = vmatpush1.msra.mxu0 0.0
    %754 = vmatprep.subr.mxu0 0.0
    %755 = vmatpush1.msra.mxu0 0.0
    %756 = vmatprep.mubr.f32.mxu0 0.0
    %757 = vmatmul.mubr.f32.gmra.mrb[0].mxu0 %v556
    %v758 = vpop.f32.mrb[0].mxu0
    %v759 = vadd.f32 0.0, %v758
    %v760 = vpop.f32.mrb[0].mxu0
    %v761 = vadd.f32 0.0, %v760
    %762 = vmatprep.mubr.f32.mxu0 0.0
    %763 = vmatmul.mubr.f32.gmra.mrb[0].mxu0 %v559
    %v764 = vpop.f32.mrb[0].mxu0
    %v765 = vadd.f32 0.0, %v764
    %v766 = vpop.f32.mrb[0].mxu0
    %v767 = vadd.f32 0.0, %v766
    %768 = vmatprep.mubr.f32.mxu0 0.0
    %769 = vmatmul.mubr.f32.gmra.mrb[0].mxu0 %v562
    %v770 = vpop.f32.mrb[0].mxu0
    %v771 = vadd.f32 0.0, %v770
    %v772 = vpop.f32.mrb[0].mxu0
    %v773 = vadd.f32 0.0, %v772
    %774 = vmatprep.mubr.f32.mxu0 0.0
    %775 = vmatmul.mubr.f32.gmra.mrb[0].mxu0 %v565
    %v776 = vpop.f32.mrb[0].mxu0
    %v777 = vadd.f32 0.0, %v776
    %v778 = vpop.f32.mrb[0].mxu0
    %v779 = vadd.f32 0.0, %v778
    %780 = vmatprep.mubr.f32.mxu0 0.0
    %781 = vmatmul.mubr.f32.gmra.mrb[0].mxu0 %v568
    %v782 = vpop.f32.mrb[0].mxu0
    %v783 = vadd.f32 0.0, %v782
    %v784 = vpop.f32.mrb[0].mxu0
    %v785 = vadd.f32 0.0, %v784
    %786 = vmatprep.mubr.f32.mxu0 0.0
    %787 = vmatmul.mubr.f32.gmra.mrb[0].mxu0 %v571
    %v788 = vpop.f32.mrb[0].mxu0
    %v789 = vadd.f32 0.0, %v788
    %v790 = vpop.f32.mrb[0].mxu0
    %v791 = vadd.f32 0.0, %v790
    %792 = vmatprep.mubr.f32.mxu0 0.0
    %793 = vmatmul.mubr.f32.gmra.mrb[0].mxu0 %v574
    %v794 = vpop.f32.mrb[0].mxu0
    %v795 = vadd.f32 0.0, %v794
    %v796 = vpop.f32.mrb[0].mxu0
    %v797 = vadd.f32 0.0, %v796
    %798 = vmatprep.mubr.f32.mxu0 0.0
    %799 = vmatmul.mubr.f32.gmra.mrb[0].mxu0 %v577
    %v800 = vpop.f32.mrb[0].mxu0
    %v801 = vadd.f32 0.0, %v800
    %v802 = vpop.f32.mrb[0].mxu0
    %v803 = vadd.f32 0.0, %v802
    %804 = vdwg.mxu0
    %v805 = vld [vmem:[#allocation2] sm:$0xff]
    %v806 = vld [vmem:[#allocation2 + $0x8] sm:$0xff]
    %v807 = vld [vmem:[#allocation2 + $0x10] sm:$0xff]
    %v808 = vld [vmem:[#allocation2 + $0x18] sm:$0xff]
    %v809 = vld [vmem:[#allocation8] sm:$0xff]
    %v810 = vld [vmem:[#allocation8 + $0x8] sm:$0xff]
    %v811 = vld [vmem:[#allocation8 + $0x10] sm:$0xff]
    %v812 = vld [vmem:[#allocation8 + $0x18] sm:$0xff]
    %v813 = vld [vmem:[%s5] sm:$0xff]
    %v814 = vld [vmem:[%s5 + $0x8] sm:$0xff]
    %v815 = vld [vmem:[%s5 + $0x10] sm:$0xff]
    %v816 = vld [vmem:[%s5 + $0x18] sm:$0xff]
    %818 = vset.pattern.permute.xlu0 0
    %819 = vperm.xlu0 %818, %v813
    %v820 = vpop.permute.xlu0 %819
    %823 = vset.pattern.permute.xlu0 0
    %824 = vperm.xlu0 %823, %v814
    %v825 = vpop.permute.xlu0 %824
    %828 = vset.pattern.permute.xlu0 0
    %829 = vperm.xlu0 %828, %v815
    %v830 = vpop.permute.xlu0 %829
    %833 = vset.pattern.permute.xlu0 0
    %834 = vperm.xlu0 %833, %v816
    %v835 = vpop.permute.xlu0 %834
    %vm837 = vcmask 982016
    %v839 = vsel %vm837, %v809, 0
    %v842 = vsel %vm837, %v810, 0
    %v845 = vsel %vm837, %v811, 0
    %v848 = vsel %vm837, %v812, 0
    %850 = vmatprep.subr.mxu0 %v806
    %851 = vmatpush1.msra.mxu0 %v805
    %852 = vmatprep.subr.mxu0 %v246
    %853 = vmatpush1.msra.mxu0 %v244
    %854 = vmatprep.subr.mxu0 %v252
    %855 = vmatpush1.msra.mxu0 %v250
    %856 = vmatprep.subr.mxu0 %v433
    %857 = vmatpush1.msra.mxu0 %v431
    %858 = vmatprep.subr.mxu0 %v439
    %859 = vmatpush1.msra.mxu0 %v437
    %860 = vmatprep.subr.mxu0 %v445
    %861 = vmatpush1.msra.mxu0 %v443
    %862 = vmatprep.subr.mxu0 %v451
    %863 = vmatpush1.msra.mxu0 %v449
    %864 = vmatprep.subr.mxu0 %v648
    %865 = vmatpush1.msra.mxu0 %v646
    %866 = vmatprep.subr.mxu0 %v654
    %867 = vmatpush1.msra.mxu0 %v652
    %868 = vmatprep.subr.mxu0 %v660
    %869 = vmatpush1.msra.mxu0 %v658
    %870 = vmatprep.subr.mxu0 %v666
    %871 = vmatpush1.msra.mxu0 %v664
    %872 = vmatprep.subr.mxu0 %v672
    %873 = vmatpush1.msra.mxu0 %v670
    %874 = vmatprep.subr.mxu0 %v678
    %875 = vmatpush1.msra.mxu0 %v676
    %876 = vmatprep.subr.mxu0 %v684
    %877 = vmatpush1.msra.mxu0 %v682
    %878 = vmatprep.subr.mxu0 %v690
    %879 = vmatpush1.msra.mxu0 %v688
    %880 = vmatprep.subr.mxu0 0.0
    %881 = vmatpush1.msra.mxu0 0.0
    %882 = vmatprep.subr.mxu0 0.0
    %883 = vmatpush1.msra.mxu0 0.0
    %884 = vmatprep.subr.mxu0 0.0
    %885 = vmatpush1.msra.mxu0 0.0
    %886 = vmatprep.subr.mxu0 0.0
    %887 = vmatpush1.msra.mxu0 0.0
    %888 = vmatprep.subr.mxu0 0.0
    %889 = vmatpush1.msra.mxu0 0.0
    %890 = vmatprep.subr.mxu0 0.0
    %891 = vmatpush1.msra.mxu0 0.0
    %892 = vmatprep.subr.mxu0 0.0
    %893 = vmatpush1.msra.mxu0 0.0
    %894 = vmatprep.subr.mxu0 0.0
    %895 = vmatpush1.msra.mxu0 0.0
    %896 = vmatprep.subr.mxu0 0.0
    %897 = vmatpush1.msra.mxu0 0.0
    %898 = vmatprep.subr.mxu0 0.0
    %899 = vmatpush1.msra.mxu0 0.0
    %900 = vmatprep.subr.mxu0 0.0
    %901 = vmatpush1.msra.mxu0 0.0
    %902 = vmatprep.subr.mxu0 0.0
    %903 = vmatpush1.msra.mxu0 0.0
    %904 = vmatprep.subr.mxu0 0.0
    %905 = vmatpush1.msra.mxu0 0.0
    %906 = vmatprep.subr.mxu0 0.0
    %907 = vmatpush1.msra.mxu0 0.0
    %908 = vmatprep.subr.mxu0 0.0
    %909 = vmatpush1.msra.mxu0 0.0
    %910 = vmatprep.subr.mxu0 0.0
    %911 = vmatpush1.msra.mxu0 0.0
    %912 = vmatprep.subr.mxu0 0.0
    %913 = vmatpush1.msra.mxu0 0.0
    %914 = vmatprep.mubr.f32.mxu0 0.0
    %915 = vmatmul.mubr.f32.gmra.mrb[0].mxu0 %v839
    %v916 = vpop.f32.mrb[0].mxu0
    %v917 = vadd.f32 %v820, %v916
    %v918 = vpop.f32.mrb[0].mxu0
    %v919 = vadd.f32 %v820, %v918
    %920 = vmatprep.mubr.f32.mxu0 0.0
    %921 = vmatmul.mubr.f32.gmra.mrb[0].mxu0 %v842
    %v922 = vpop.f32.mrb[0].mxu0
    %v923 = vadd.f32 %v825, %v922
    %v924 = vpop.f32.mrb[0].mxu0
    %v925 = vadd.f32 %v825, %v924
    %926 = vmatprep.mubr.f32.mxu0 0.0
    %927 = vmatmul.mubr.f32.gmra.mrb[0].mxu0 %v845
    %v928 = vpop.f32.mrb[0].mxu0
    %v929 = vadd.f32 %v830, %v928
    %v930 = vpop.f32.mrb[0].mxu0
    %v931 = vadd.f32 %v830, %v930
    %932 = vmatprep.mubr.f32.mxu0 0.0
    %933 = vmatmul.mubr.f32.gmra.mrb[0].mxu0 %v848
    %v934 = vpop.f32.mrb[0].mxu0
    %v935 = vadd.f32 %v835, %v934
    %v936 = vpop.f32.mrb[0].mxu0
    %v937 = vadd.f32 %v835, %v936
    %938 = vdwg.mxu0
    %939 = vmatprep.subr.mxu0 %v808
    %940 = vmatpush1.msra.mxu0 %v807
    %941 = vmatprep.subr.mxu0 %v323
    %942 = vmatpush1.msra.mxu0 %v321
    %943 = vmatprep.subr.mxu0 %v329
    %944 = vmatpush1.msra.mxu0 %v327
    %945 = vmatprep.subr.mxu0 %v522
    %946 = vmatpush1.msra.mxu0 %v520
    %947 = vmatprep.subr.mxu0 %v528
    %948 = vmatpush1.msra.mxu0 %v526
    %949 = vmatprep.subr.mxu0 %v534
    %950 = vmatpush1.msra.mxu0 %v532
    %951 = vmatprep.subr.mxu0 %v540
    %952 = vmatpush1.msra.mxu0 %v538
    %953 = vmatprep.subr.mxu0 %v761
    %954 = vmatpush1.msra.mxu0 %v759
    %955 = vmatprep.subr.mxu0 %v767
    %956 = vmatpush1.msra.mxu0 %v765
    %957 = vmatprep.subr.mxu0 %v773
    %958 = vmatpush1.msra.mxu0 %v771
    %959 = vmatprep.subr.mxu0 %v779
    %960 = vmatpush1.msra.mxu0 %v777
    %961 = vmatprep.subr.mxu0 %v785
    %962 = vmatpush1.msra.mxu0 %v783
    %963 = vmatprep.subr.mxu0 %v791
    %964 = vmatpush1.msra.mxu0 %v789
    %965 = vmatprep.subr.mxu0 %v797
    %966 = vmatpush1.msra.mxu0 %v795
    %967 = vmatprep.subr.mxu0 %v803
    %968 = vmatpush1.msra.mxu0 %v801
    %969 = vmatprep.subr.mxu0 0.0
    %970 = vmatpush1.msra.mxu0 0.0
    %971 = vmatprep.subr.mxu0 0.0
    %972 = vmatpush1.msra.mxu0 0.0
    %973 = vmatprep.subr.mxu0 0.0
    %974 = vmatpush1.msra.mxu0 0.0
    %975 = vmatprep.subr.mxu0 0.0
    %976 = vmatpush1.msra.mxu0 0.0
    %977 = vmatprep.subr.mxu0 0.0
    %978 = vmatpush1.msra.mxu0 0.0
    %979 = vmatprep.subr.mxu0 0.0
    %980 = vmatpush1.msra.mxu0 0.0
    %981 = vmatprep.subr.mxu0 0.0
    %982 = vmatpush1.msra.mxu0 0.0
    %983 = vmatprep.subr.mxu0 0.0
    %984 = vmatpush1.msra.mxu0 0.0
    %985 = vmatprep.subr.mxu0 0.0
    %986 = vmatpush1.msra.mxu0 0.0
    %987 = vmatprep.subr.mxu0 0.0
    %988 = vmatpush1.msra.mxu0 0.0
    %989 = vmatprep.subr.mxu0 0.0
    %990 = vmatpush1.msra.mxu0 0.0
    %991 = vmatprep.subr.mxu0 0.0
    %992 = vmatpush1.msra.mxu0 0.0
    %993 = vmatprep.subr.mxu0 0.0
    %994 = vmatpush1.msra.mxu0 0.0
    %995 = vmatprep.subr.mxu0 0.0
    %996 = vmatpush1.msra.mxu0 0.0
    %997 = vmatprep.subr.mxu0 0.0
    %998 = vmatpush1.msra.mxu0 0.0
    %999 = vmatprep.subr.mxu0 0.0
    %1000 = vmatpush1.msra.mxu0 0.0
    %1001 = vmatprep.subr.mxu0 0.0
    %1002 = vmatpush1.msra.mxu0 0.0
    %1003 = vmatprep.mubr.f32.mxu0 0.0
    %1004 = vmatmul.mubr.f32.gmra.mrb[0].mxu0 %v839
    %v1005 = vpop.f32.mrb[0].mxu0
    %v1006 = vadd.f32 %v820, %v1005
    %v1007 = vpop.f32.mrb[0].mxu0
    %v1008 = vadd.f32 %v820, %v1007
    %1009 = vmatprep.mubr.f32.mxu0 0.0
    %1010 = vmatmul.mubr.f32.gmra.mrb[0].mxu0 %v842
    %v1011 = vpop.f32.mrb[0].mxu0
    %v1012 = vadd.f32 %v825, %v1011
    %v1013 = vpop.f32.mrb[0].mxu0
    %v1014 = vadd.f32 %v825, %v1013
    %1015 = vmatprep.mubr.f32.mxu0 0.0
    %1016 = vmatmul.mubr.f32.gmra.mrb[0].mxu0 %v845
    %v1017 = vpop.f32.mrb[0].mxu0
    %v1018 = vadd.f32 %v830, %v1017
    %v1019 = vpop.f32.mrb[0].mxu0
    %v1020 = vadd.f32 %v830, %v1019
    %1021 = vmatprep.mubr.f32.mxu0 0.0
    %1022 = vmatmul.mubr.f32.gmra.mrb[0].mxu0 %v848
    %v1023 = vpop.f32.mrb[0].mxu0
    %v1024 = vadd.f32 %v835, %v1023
    %v1025 = vpop.f32.mrb[0].mxu0
    %v1026 = vadd.f32 %v835, %v1025
    %1027 = vdwg.mxu0
    %1028 = vst [vmem:[#allocation13] sm:$0xff] %v917
    %1029 = vst [vmem:[#allocation13 + $0x8] sm:$0xff] %v919
    %1030 = vst [vmem:[#allocation13 + $0x10] sm:$0xff] %v1006
    %1031 = vst [vmem:[#allocation13 + $0x18] sm:$0xff] %v1008
    %1032 = vst [vmem:[#allocation13 + $0x20] sm:$0xff] %v923
    %1033 = vst [vmem:[#allocation13 + $0x28] sm:$0xff] %v925
    %1034 = vst [vmem:[#allocation13 + $0x30] sm:$0xff] %v1012
    %1035 = vst [vmem:[#allocation13 + $0x38] sm:$0xff] %v1014
    %1036 = vst [vmem:[#allocation13 + $0x40] sm:$0xff] %v929
    %1037 = vst [vmem:[#allocation13 + $0x48] sm:$0xff] %v931
    %1038 = vst [vmem:[#allocation13 + $0x50] sm:$0xff] %v1018
    %1039 = vst [vmem:[#allocation13 + $0x58] sm:$0xff] %v1020
    %1040 = vst [vmem:[#allocation13 + $0x60] sm:$0xff] %v935
    %1041 = vst [vmem:[#allocation13 + $0x68] sm:$0xff] %v937
    %1042 = vst [vmem:[#allocation13 + $0x70] sm:$0xff] %v1024
    %1043 = vst [vmem:[#allocation13 + $0x78] sm:$0xff] %v1026
    // Predicated region
    $region62: #{tpu_custom_call.1} parent=1 // pred_check
      _
    $region63: #{tpu_custom_call.1} parent=1 // pred_check_branch
      %1045 = sbr.rel (0) target = $region65
    $region64: #{tpu_custom_call.1} parent=1 // pred_region
      %s1047 = ssub.s32 2048, 2048
      %1048 = vsyncadd [#allocation4], %s1047
      %s1049 = sshll.u32 [#allocation13], 4
      %s1050 = int_to_ptr.vmem [resolvable:$true] %s1049
      %1055 = dma.vmem_to_hbm [thread:$0]  %s1050, 2048, %s9, [#allocation4], 512, 512, 32
    $region65: #{tpu_custom_call.1} parent=1 // pred_fallthru
      _
    // Predicated region
    $region66: #{tpu_custom_call.1} parent=1 // pred_check
      _
    $region67: #{tpu_custom_call.1} parent=1 // pred_check_branch
      %1057 = sbr.rel (0) target = $region69
    $region68: #{tpu_custom_call.1} parent=1 // pred_region
      %1058 = dma.done [#allocation4], 2048
    $region69: #{tpu_custom_call.1} parent=1 // pred_fallthru
      _
    %1059 = vsyncpa [#allocation3], 1
    %1060 = vsyncpa [#allocation6], 1
    %1061 = vsyncpa [#allocation9], 1
    %1062 = vsyncpa [#allocation12], 1
    %1063 = vsyncpa [#allocation4], 1

</llo_original>
